<compile_context>
chip_gen: v5e
topology: v5e:2x2
jax: 0.10.0
libtpu: 0.0.40
codegen_flags: <defaults>
</compile_context>

<pallas_src>
import functools
import math

import jax
import jax.numpy as jnp
from jax.experimental import pallas as pl
from jax.experimental.pallas import tpu as pltpu


def rbf_kmeans_kernel(nhg_ref, vpos_ref, vneg_ref, pt_ref, x_ref,
                      pm_ref, mass_ref, *, K, chunk):
    """One (C, tn) tile of voxels for one batch element.

    nhg_ref  : SMEM (K,)   -0.5 * gamm**2 (precomputed host-side)
    vpos_ref : SMEM (K,)   max(V, 0)
    vneg_ref : SMEM (K,)   max(-V, 0)
    pt_ref   : VMEM (C, K) prototypes, transposed
    x_ref    : VMEM (C, tn)  features
    pm_ref   : VMEM (2, tn)  rows = pm1, pm2
    mass_ref : VMEM (3, tn)  rows = mass1, mass2, mass_omega
    """
    tn = x_ref.shape[-1]
    n_chunks = tn // chunk

    @pl.loop(0, n_chunks)
    def _(ci):
        off = pl.multiple_of(ci * chunk, chunk)
        x = x_ref[:, pl.ds(off, chunk)].astype(jnp.float32)       # (C, chunk)

        w_pc = jnp.zeros((1, chunk), jnp.float32)
        w_nc = jnp.zeros((1, chunk), jnp.float32)

        # prototype_dim is small and static -> unrolled Python loop.
        for j in range(K):
            p_j = pt_ref[:, j:j + 1]                              # (C, 1)
            diff = x - p_j
            d = jnp.sum(diff * diff, axis=0, keepdims=True)       # (1, chunk)
            s = jnp.exp(nhg_ref[j] * d)                           # exp(-0.5*g^2*d)
            # sign(V_j * s) == sign(V_j) since s > 0, so split V host-side.
            w_pc = w_pc + vpos_ref[j] * s
            w_nc = w_nc + vneg_ref[j] * s

        e_p = jnp.exp(-w_pc)
        e_n = jnp.exp(-w_nc)

        denom = e_n + e_p
        inv_denom = pl.reciprocal(denom, approx=True)
        # Two Newton-Raphson refinements (cheap VALU work) -> ~exact 1/denom.
        inv_denom = inv_denom * (2.0 - denom * inv_denom)
        inv_denom = inv_denom * (2.0 - denom * inv_denom)
        pm_ref[0:1, pl.ds(off, chunk)] = e_n * inv_denom
        pm_ref[1:2, pl.ds(off, chunk)] = e_p * inv_denom

        one_m_ep = 1.0 - e_p
        one_m_en = 1.0 - e_n
        kd = 1.0 - one_m_ep * one_m_en                            # 1 - kapa_c
        kapa = pl.reciprocal(kd, approx=True)
        kapa = kapa * (2.0 - kd * kapa)
        kapa = kapa * (2.0 - kd * kapa)
        mass_ref[0:1, pl.ds(off, chunk)] = kapa * one_m_ep * e_n
        mass_ref[1:2, pl.ds(off, chunk)] = kapa * one_m_en * e_p
        mass_ref[2:3, pl.ds(off, chunk)] = kapa * (e_p * e_n)     # exp(-w_pc-w_nc)


def _pick_lane_tile(nvox, tn_max):
    """Largest multiple of 128 that divides nvox and is <= tn_max."""
    tn = min(tn_max, nvox)
    tn -= tn % 128
    while tn >= 128:
        if nvox % tn == 0:
            return tn
        tn -= 128
    raise ValueError("flattened per-batch voxel count must be a multiple of 128")


def rbf_kmeans_forward(x, P, gamm, V, *, tn_max=32768, chunk_max=2048):
    """x: [B, C, H, W, D]. Returns (pm [B,2,H,W,D], mass [B,3,H,W,D]).

    tn_max: lane tile per grid step. 32768 amortizes the ~0.35us/step pipeline
    overhead on v5e/v6e; bump to 65536..131072 on v7x (still well inside the
    32 MiB scoped-VMEM default there).
    """
    B, C, H, W, D = x.shape
    K = P.shape[0]
    Nvox = H * W * D

    tn = _pick_lane_tile(Nvox, tn_max)
    chunk = math.gcd(tn, chunk_max)                # multiple of 128, divides tn

    x3 = x.reshape(B, C, Nvox)                     # free reshape, no transpose
    pt = jnp.transpose(P).astype(jnp.float32)      # (C, K), parameter-sized
    g = gamm.reshape(K).astype(jnp.float32)
    v = V.reshape(K).astype(jnp.float32)
    nhg = -0.5 * g * g                             # -0.5 * gamma
    v_pos = jnp.maximum(v, 0.0)
    v_neg = jnp.maximum(-v, 0.0)

    pm_raw, mass_raw = pl.pallas_call(
        functools.partial(rbf_kmeans_kernel, K=K, chunk=chunk),
        out_shape=(jax.ShapeDtypeStruct((B, 2, Nvox), jnp.float32),
                   jax.ShapeDtypeStruct((B, 3, Nvox), jnp.float32)),
        grid=(B, Nvox // tn),
        in_specs=[
            pl.BlockSpec(memory_space=pltpu.MemorySpace.SMEM),     # -0.5*gamm^2
            pl.BlockSpec(memory_space=pltpu.MemorySpace.SMEM),     # max(V, 0)
            pl.BlockSpec(memory_space=pltpu.MemorySpace.SMEM),     # max(-V, 0)
            pl.BlockSpec((C, K), lambda b, i: (0, 0)),             # P^T (whole)
            pl.BlockSpec((None, C, tn), lambda b, i: (b, 0, i)),   # x tile
        ],
        out_specs=(
            pl.BlockSpec((None, 2, tn), lambda b, i: (b, 0, i)),   # pm tile
            pl.BlockSpec((None, 3, tn), lambda b, i: (b, 0, i)),   # mass tile
        ),
        compiler_params=pltpu.CompilerParams(
            dimension_semantics=("parallel", "parallel")),
    )(nhg, v_pos, v_neg, pt, x3)

    pm = pm_raw.reshape(B, 2, H, W, D)             # free reshapes
    mass = mass_raw.reshape(B, 3, H, W, D)
    return pm, mass


def rbf_kmeans_reference(x, P, gamm, V):
    """Pure-JAX port of the PyTorch forward, for verification."""
    B, C, H, W, D = x.shape
    gamma = gamm ** 2                                            # (K, 1)
    diff = x[:, None, :, :, :, :] - P[None, :, :, None, None, None]
    d = jnp.sum(diff ** 2, axis=2)                               # [B, K, H, W, D]
    s = jnp.exp(-0.5 * gamma[None, :, 0, None, None, None] * d)
    w = V[None, :, 0, None, None, None] * s                      # [B, K, H, W, D]
    zero = jnp.zeros_like(w)
    w_pc = jnp.sum(jnp.where(w > 0, w, zero), axis=1)            # [B, H, W, D]
    w_nc = jnp.sum(jnp.where(w < 0, -w, zero), axis=1)
    e_p = jnp.exp(-w_pc)
    e_n = jnp.exp(-w_nc)
    denom = e_n + e_p
    pm = jnp.stack([e_n / denom, e_p / denom], axis=1)
    kapa = 1.0 / (1.0 - (1.0 - e_p) * (1.0 - e_n))
    mass = jnp.stack([kapa * (1.0 - e_p) * e_n,
                      kapa * (1.0 - e_n) * e_p,
                      kapa * jnp.exp(-w_pc - w_nc)], axis=1)
    return pm, mass


if __name__ == "__main__":
    key = jax.random.PRNGKey(0)
    B, C, H, W, D = 2, 4, 8, 8, 8          # input_dim = C = 4
    K = 2                                   # prototype_dim = 2

    k_x, k_p, k_v = jax.random.split(key, 3)
    x = jax.random.normal(k_x, (B, C, H, W, D), jnp.float32)
    # Deterministic "parameters" (module's reset_parameters semantics):
    prototype = jax.random.normal(k_p, (K, C), jnp.float32)   # P <- prototype
    V = jax.random.normal(k_v, (K, 1), jnp.float32)           # nn.init.normal_
    gamm = jnp.full((K, 1), 0.1, jnp.float32)                 # nn.init.constant_(0.1)

    pm, mass = rbf_kmeans_forward(x, prototype, gamm, V)
    pm = jax.block_until_ready(pm)
    mass = jax.block_until_ready(mass)

    pm_ref, mass_ref = rbf_kmeans_reference(x, prototype, gamm, V)
    assert pm.shape == (B, 2, H, W, D) and mass.shape == (B, 3, H, W, D)
    assert jnp.allclose(pm, pm_ref, atol=1e-5, rtol=1e-5)
    assert jnp.allclose(mass, mass_ref, atol=1e-5, rtol=1e-5)

    print("KERNEL_OK")
</pallas_src>

<mosaic_0001>
module attributes {stable_mosaic.version = 11 : i64} {
  func.func @rbf_kmeans_kernel(%arg0: i32, %arg1: i32, %arg2: memref<2xf32, #tpu.memory_space<smem>>, %arg3: memref<2xf32, #tpu.memory_space<smem>>, %arg4: memref<2xf32, #tpu.memory_space<smem>>, %arg5: memref<4x2xf32, #tpu.memory_space<vmem>>, %arg6: memref<1x4x512xf32, #tpu.memory_space<vmem>>, %arg7: memref<1x2x512xf32, #tpu.memory_space<vmem>>, %arg8: memref<1x3x512xf32, #tpu.memory_space<vmem>>) attributes {dimension_semantics = [#tpu.dimension_semantics<parallel>, #tpu.dimension_semantics<parallel>], iteration_bounds = array<i64: 2, 1>, scalar_prefetch = 0 : i64, scratch_operands = 0 : i64, tpu.core_type = #tpu.core_type<tc>, window_params = [{transform_indices = @transform_0, window_bounds = array<i64: 2>}, {transform_indices = @transform_1, window_bounds = array<i64: 2>}, {transform_indices = @transform_2, window_bounds = array<i64: 2>}, {pipeline_mode = #tpu.pipeline_mode<synchronous>, transform_indices = @transform_3, window_bounds = array<i64: 4, 2>}, {transform_indices = @transform_4, window_bounds = array<i64: 1, 4, 512>}, {transform_indices = @transform_5, window_bounds = array<i64: 1, 2, 512>}, {transform_indices = @transform_6, window_bounds = array<i64: 1, 3, 512>}]} {
    %c0_i32 = arith.constant 0 : i32
    %c1_i32 = arith.constant 1 : i32
    %0 = arith.muli %c0_i32, %c1_i32 : i32
    %c0_i32_0 = arith.constant 0 : i32
    %1 = arith.addi %c0_i32_0, %0 : i32
    %c512_i32 = arith.constant 512 : i32
    %2 = arith.muli %1, %c512_i32 : i32
    %3 = tpu.assume_multiple %2, 512 : i32
    %c0 = arith.constant 0 : index
    %c0_1 = arith.constant 0 : index
    %4 = arith.index_cast %3 : i32 to index
    %5 = vector.load %arg6[%c0, %c0_1, %4] : memref<1x4x512xf32, #tpu.memory_space<vmem>>, vector<1x4x512xf32>
    %6 = vector.shape_cast %5 : vector<1x4x512xf32> to vector<4x512xf32>
    %cst = arith.constant 0.000000e+00 : f32
    %7 = vector.broadcast %cst : f32 to vector<1x512xf32>
    %cst_2 = arith.constant 0.000000e+00 : f32
    %8 = vector.broadcast %cst_2 : f32 to vector<1x512xf32>
    %c0_3 = arith.constant 0 : index
    %c0_4 = arith.constant 0 : index
    %9 = vector.load %arg5[%c0_3, %c0_4] : memref<4x2xf32, #tpu.memory_space<vmem>>, vector<4x1xf32>
    %10 = vector.broadcast %9 : vector<4x1xf32> to vector<4x512xf32>
    %11 = arith.subf %6, %10 : vector<4x512xf32>
    %12 = arith.mulf %11, %11 : vector<4x512xf32>
    %cst_5 = arith.constant dense<0.000000e+00> : vector<512xf32>
    %13 = vector.multi_reduction <add>, %12, %cst_5 [0] : vector<4x512xf32> to vector<512xf32>
    %14 = vector.shape_cast %13 : vector<512xf32> to vector<1x512xf32>
    %c0_6 = arith.constant 0 : index
    %15 = memref.load %arg2[%c0_6] : memref<2xf32, #tpu.memory_space<smem>>
    %16 = vector.broadcast %15 : f32 to vector<1x512xf32>
    %17 = arith.mulf %16, %14 : vector<1x512xf32>
    %18 = math.exp %17 : vector<1x512xf32>
    %c0_7 = arith.constant 0 : index
    %19 = memref.load %arg3[%c0_7] : memref<2xf32, #tpu.memory_space<smem>>
    %20 = vector.broadcast %19 : f32 to vector<1x512xf32>
    %21 = arith.mulf %20, %18 : vector<1x512xf32>
    %22 = arith.addf %7, %21 : vector<1x512xf32>
    %c0_8 = arith.constant 0 : index
    %23 = memref.load %arg4[%c0_8] : memref<2xf32, #tpu.memory_space<smem>>
    %24 = vector.broadcast %23 : f32 to vector<1x512xf32>
    %25 = arith.mulf %24, %18 : vector<1x512xf32>
    %26 = arith.addf %8, %25 : vector<1x512xf32>
    %c0_9 = arith.constant 0 : index
    %c1 = arith.constant 1 : index
    %27 = vector.load %arg5[%c0_9, %c1] : memref<4x2xf32, #tpu.memory_space<vmem>>, vector<4x1xf32>
    %28 = vector.broadcast %27 : vector<4x1xf32> to vector<4x512xf32>
    %29 = arith.subf %6, %28 : vector<4x512xf32>
    %30 = arith.mulf %29, %29 : vector<4x512xf32>
    %cst_10 = arith.constant dense<0.000000e+00> : vector<512xf32>
    %31 = vector.multi_reduction <add>, %30, %cst_10 [0] : vector<4x512xf32> to vector<512xf32>
    %32 = vector.shape_cast %31 : vector<512xf32> to vector<1x512xf32>
    %c1_11 = arith.constant 1 : index
    %33 = memref.load %arg2[%c1_11] : memref<2xf32, #tpu.memory_space<smem>>
    %34 = vector.broadcast %33 : f32 to vector<1x512xf32>
    %35 = arith.mulf %34, %32 : vector<1x512xf32>
    %36 = math.exp %35 : vector<1x512xf32>
    %c1_12 = arith.constant 1 : index
    %37 = memref.load %arg3[%c1_12] : memref<2xf32, #tpu.memory_space<smem>>
    %38 = vector.broadcast %37 : f32 to vector<1x512xf32>
    %39 = arith.mulf %38, %36 : vector<1x512xf32>
    %40 = arith.addf %22, %39 : vector<1x512xf32>
    %c1_13 = arith.constant 1 : index
    %41 = memref.load %arg4[%c1_13] : memref<2xf32, #tpu.memory_space<smem>>
    %42 = vector.broadcast %41 : f32 to vector<1x512xf32>
    %43 = arith.mulf %42, %36 : vector<1x512xf32>
    %44 = arith.addf %26, %43 : vector<1x512xf32>
    %cst_14 = arith.constant 0.000000e+00 : f32
    %45 = vector.broadcast %cst_14 : f32 to vector<1x512xf32>
    %46 = arith.subf %45, %40 : vector<1x512xf32>
    %47 = math.exp %46 : vector<1x512xf32>
    %cst_15 = arith.constant 0.000000e+00 : f32
    %48 = vector.broadcast %cst_15 : f32 to vector<1x512xf32>
    %49 = arith.subf %48, %44 : vector<1x512xf32>
    %50 = math.exp %49 : vector<1x512xf32>
    %51 = arith.addf %50, %47 : vector<1x512xf32>
    %52 = tpu.reciprocal %51 {approx = true} : vector<1x512xf32> -> vector<1x512xf32>
    %53 = arith.mulf %51, %52 : vector<1x512xf32>
    %cst_16 = arith.constant 2.000000e+00 : f32
    %54 = vector.broadcast %cst_16 : f32 to vector<1x512xf32>
    %55 = arith.subf %54, %53 : vector<1x512xf32>
    %56 = arith.mulf %52, %55 : vector<1x512xf32>
    %57 = arith.mulf %51, %56 : vector<1x512xf32>
    %cst_17 = arith.constant 2.000000e+00 : f32
    %58 = vector.broadcast %cst_17 : f32 to vector<1x512xf32>
    %59 = arith.subf %58, %57 : vector<1x512xf32>
    %60 = arith.mulf %56, %59 : vector<1x512xf32>
    %61 = arith.mulf %50, %60 : vector<1x512xf32>
    %c0_18 = arith.constant 0 : index
    %c0_19 = arith.constant 0 : index
    %62 = arith.index_cast %3 : i32 to index
    %63 = vector.load %arg7[%c0_18, %c0_19, %62] : memref<1x2x512xf32, #tpu.memory_space<vmem>>, vector<1x1x512xf32>
    %64 = vector.shape_cast %63 : vector<1x1x512xf32> to vector<1x512xf32>
    %65 = vector.shape_cast %61 : vector<1x512xf32> to vector<1x1x512xf32>
    tpu.vector_store %arg7[%c0_18, %c0_19, %62], %65 {strides = array<i32>} : memref<1x2x512xf32, #tpu.memory_space<vmem>>, vector<1x1x512xf32>,
    %66 = arith.mulf %47, %60 : vector<1x512xf32>
    %c0_20 = arith.constant 0 : index
    %c1_21 = arith.constant 1 : index
    %67 = arith.index_cast %3 : i32 to index
    %68 = vector.load %arg7[%c0_20, %c1_21, %67] : memref<1x2x512xf32, #tpu.memory_space<vmem>>, vector<1x1x512xf32>
    %69 = vector.shape_cast %68 : vector<1x1x512xf32> to vector<1x512xf32>
    %70 = vector.shape_cast %66 : vector<1x512xf32> to vector<1x1x512xf32>
    tpu.vector_store %arg7[%c0_20, %c1_21, %67], %70 {strides = array<i32>} : memref<1x2x512xf32, #tpu.memory_space<vmem>>, vector<1x1x512xf32>,
    %cst_22 = arith.constant 1.000000e+00 : f32
    %71 = vector.broadcast %cst_22 : f32 to vector<1x512xf32>
    %72 = arith.subf %71, %47 : vector<1x512xf32>
    %cst_23 = arith.constant 1.000000e+00 : f32
    %73 = vector.broadcast %cst_23 : f32 to vector<1x512xf32>
    %74 = arith.subf %73, %50 : vector<1x512xf32>
    %75 = arith.mulf %72, %74 : vector<1x512xf32>
    %cst_24 = arith.constant 1.000000e+00 : f32
    %76 = vector.broadcast %cst_24 : f32 to vector<1x512xf32>
    %77 = arith.subf %76, %75 : vector<1x512xf32>
    %78 = tpu.reciprocal %77 {approx = true} : vector<1x512xf32> -> vector<1x512xf32>
    %79 = arith.mulf %77, %78 : vector<1x512xf32>
    %cst_25 = arith.constant 2.000000e+00 : f32
    %80 = vector.broadcast %cst_25 : f32 to vector<1x512xf32>
    %81 = arith.subf %80, %79 : vector<1x512xf32>
    %82 = arith.mulf %78, %81 : vector<1x512xf32>
    %83 = arith.mulf %77, %82 : vector<1x512xf32>
    %cst_26 = arith.constant 2.000000e+00 : f32
    %84 = vector.broadcast %cst_26 : f32 to vector<1x512xf32>
    %85 = arith.subf %84, %83 : vector<1x512xf32>
    %86 = arith.mulf %82, %85 : vector<1x512xf32>
    %87 = arith.mulf %86, %72 : vector<1x512xf32>
    %88 = arith.mulf %87, %50 : vector<1x512xf32>
    %c0_27 = arith.constant 0 : index
    %c0_28 = arith.constant 0 : index
    %89 = arith.index_cast %3 : i32 to index
    %90 = vector.load %arg8[%c0_27, %c0_28, %89] : memref<1x3x512xf32, #tpu.memory_space<vmem>>, vector<1x1x512xf32>
    %91 = vector.shape_cast %90 : vector<1x1x512xf32> to vector<1x512xf32>
    %92 = vector.shape_cast %88 : vector<1x512xf32> to vector<1x1x512xf32>
    tpu.vector_store %arg8[%c0_27, %c0_28, %89], %92 {strides = array<i32>} : memref<1x3x512xf32, #tpu.memory_space<vmem>>, vector<1x1x512xf32>,
    %93 = arith.mulf %86, %74 : vector<1x512xf32>
    %94 = arith.mulf %93, %47 : vector<1x512xf32>
    %c0_29 = arith.constant 0 : index
    %c1_30 = arith.constant 1 : index
    %95 = arith.index_cast %3 : i32 to index
    %96 = vector.load %arg8[%c0_29, %c1_30, %95] : memref<1x3x512xf32, #tpu.memory_space<vmem>>, vector<1x1x512xf32>
    %97 = vector.shape_cast %96 : vector<1x1x512xf32> to vector<1x512xf32>
    %98 = vector.shape_cast %94 : vector<1x512xf32> to vector<1x1x512xf32>
    tpu.vector_store %arg8[%c0_29, %c1_30, %95], %98 {strides = array<i32>} : memref<1x3x512xf32, #tpu.memory_space<vmem>>, vector<1x1x512xf32>,
    %99 = arith.mulf %47, %50 : vector<1x512xf32>
    %100 = arith.mulf %86, %99 : vector<1x512xf32>
    %c0_31 = arith.constant 0 : index
    %c2 = arith.constant 2 : index
    %101 = arith.index_cast %3 : i32 to index
    %102 = vector.load %arg8[%c0_31, %c2, %101] : memref<1x3x512xf32, #tpu.memory_space<vmem>>, vector<1x1x512xf32>
    %103 = vector.shape_cast %102 : vector<1x1x512xf32> to vector<1x512xf32>
    %104 = vector.shape_cast %100 : vector<1x512xf32> to vector<1x1x512xf32>
    tpu.vector_store %arg8[%c0_31, %c2, %101], %104 {strides = array<i32>} : memref<1x3x512xf32, #tpu.memory_space<vmem>>, vector<1x1x512xf32>,
    %c1_i32_32 = arith.constant 1 : i32
    return
  }
  func.func @transform_0(%arg0: i32, %arg1: i32) -> i32 {
    %c0_i32 = arith.constant 0 : i32
    %c0_i32_0 = arith.constant 0 : i32
    return %c0_i32 : i32
  }
  func.func @transform_1(%arg0: i32, %arg1: i32) -> i32 {
    %c0_i32 = arith.constant 0 : i32
    %c0_i32_0 = arith.constant 0 : i32
    return %c0_i32 : i32
  }
  func.func @transform_2(%arg0: i32, %arg1: i32) -> i32 {
    %c0_i32 = arith.constant 0 : i32
    %c0_i32_0 = arith.constant 0 : i32
    return %c0_i32 : i32
  }
  func.func @transform_3(%arg0: i32, %arg1: i32) -> (i32, i32) {
    %c0_i32 = arith.constant 0 : i32
    %c0_i32_0 = arith.constant 0 : i32
    %c0_i32_1 = arith.constant 0 : i32
    return %c0_i32, %c0_i32_0 : i32, i32
  }
  func.func @transform_4(%arg0: i32, %arg1: i32) -> (i32, i32, i32) {
    %c0_i32 = arith.constant 0 : i32
    %c0_i32_0 = arith.constant 0 : i32
    return %arg0, %c0_i32, %arg1 : i32, i32, i32
  }
  func.func @transform_5(%arg0: i32, %arg1: i32) -> (i32, i32, i32) {
    %c0_i32 = arith.constant 0 : i32
    %c0_i32_0 = arith.constant 0 : i32
    return %arg0, %c0_i32, %arg1 : i32, i32, i32
  }
  func.func @transform_6(%arg0: i32, %arg1: i32) -> (i32, i32, i32) {
    %c0_i32 = arith.constant 0 : i32
    %c0_i32_0 = arith.constant 0 : i32
    return %arg0, %c0_i32, %arg1 : i32, i32, i32
  }
}

</mosaic_0001>

<llo_original>
// kernel: tpu_custom_call.1
$region0: #{tpu_custom_call.1}
  #allocation0 [shape = 'u32[]', space=smem, size = 0x4, offset = 0x4, fixed_abs, tag = 'smem constant byte address 0x4 - core index']
  #allocation1 [shape = 'u32[72,128]{1,0:T(1,128)}', space=vmem, size = 0x9000, scoped, tag = 'internal scratch']
  %s0 = inlined_call_operand.vmem [shape: f32[2], index: 0, kind: input, shape index: {}]
  %s1 = inlined_call_operand.vmem [shape: f32[2], index: 1, kind: input, shape index: {}]
  %s2 = inlined_call_operand.vmem [shape: f32[2], index: 2, kind: input, shape index: {}]
  %s3 = inlined_call_operand.vmem [shape: f32[4,2], index: 3, kind: input, shape index: {}]
  %s4 = inlined_call_operand.hbm [shape: f32[2,4,512], index: 4, kind: input, shape index: {}]
  %s5 = inlined_call_operand.hbm [shape: f32[2,2,512], index: 5, kind: output, shape index: {0}]
  %s6 = inlined_call_operand.vmem [shape: f32[2,3,512], index: 6, kind: output, shape index: {1}]
  %7 = xla_tuple %s5, %s6
  %s8 = sld [smem:[#allocation0]]
  $region77: #{tpu_custom_call.1} parent=0
    _
  %s10 = ssub.s32 1, %s8
  %s11 = scalar_select 0, %s10, %s8
  $region1: #{tpu_custom_call.1} parent=0
    #allocation2 [shape = 'u8[512]{0}', space=smem, size = 0x200, scoped, tag = 'input window, operand 0, single buffered']
    #allocation3 [shape = 's32[2]{0}', space=sflag, size = 0x8, scoped, tag = 'scoped memory for tpu_custom_call.1']
    #allocation4 [shape = 's32[2]{0}', space=sflag, size = 0x8, scoped, tag = 'scoped memory for tpu_custom_call.1']
    #allocation5 [shape = 's32[2]{0}', space=sflag, size = 0x8, scoped, tag = 'scoped memory for tpu_custom_call.1']
    #allocation6 [shape = 'u8[512]{0}', space=smem, size = 0x200, scoped, tag = 'input window, operand 1, single buffered']
    #allocation7 [shape = 's32[1]{0}', space=sflag, size = 0x4, scoped, tag = 'scoped memory for tpu_custom_call.1']
    #allocation8 [shape = 'u8[512]{0}', space=smem, size = 0x200, scoped, tag = 'input window, operand 2, single buffered']
    #allocation9 [shape = 'u8[16384]{0}', space=vmem, size = 0x4000, scoped, tag = 'input window, operand 4']
    #allocation10 [shape = 'u8[8192]{0}', space=vmem, size = 0x2000, scoped, tag = 'output window, operand 0']
    %12 = vsyncpa [#allocation5], 0
    %13 = vsyncpa [#allocation7], 0
    %14 = vsyncpa [#allocation3], 0
    %s15 = scalar_lea.sflag [#allocation3], 1
    %16 = vsyncpa %s15, 0
    %17 = vsyncpa [#allocation4], 0
    %s18 = scalar_lea.sflag [#allocation4], 1
    %19 = vsyncpa %s18, 0
    loop: start=0, step=1, limit=4
    $region2: #{tpu_custom_call.1} parent=1 // loop_pre_header
      _
    $region3: #{tpu_custom_call.1} parent=1 // loop_header
      %s21 = sphi 0, %s25
      %p22 = scmp.ge.s32.totalorder %s21, 4
      %s28 = sphi 0, %s40
      %s29 = sphi 0, %s36
      %s30 = sphi 0, %s28
      %s31 = sphi 0, %s29
      %s32 = sphi 0, %s30
      %s33 = sphi 0, %s31
      %s41 = sphi 0, %s41
      %s43 = sphi 0, %s41
      %s44 = sphi 0, %s43
      %s58 = sphi 0, %s44
      %s62 = sphi 0, %s62
      %s64 = sphi 0, %s62
      %s65 = sphi 0, %s64
      %s79 = sphi 0, %s65
      %s83 = sphi 0, %s83
      %s85 = sphi 0, %s83
      %s86 = sphi 0, %s85
      %s100 = sphi 0, %s86
      %s104 = sphi 0, %s104
      %s106 = sphi 0, %s104
      %s107 = sphi 0, %s106
      %s121 = sphi 0, %s107
      %s129 = sphi 0, %s131
      %s132 = sphi 0, %s129
      %s133 = sphi 0, %s132
      %s149 = sphi 0, %s133
      %s157 = sphi 0, %s159
      %s160 = sphi 0, %s157
      %s161 = sphi 0, %s160
      %s177 = sphi 0, %s161
      %s185 = sphi 0, %s187
      %s188 = sphi 0, %s185
      %s189 = sphi 0, %s188
      %s205 = sphi 0, %s189
    $region4: #{tpu_custom_call.1} parent=1 // loop_header_branch
      %24 = sbr.rel (%p22) target = $region8
    $region5: #{tpu_custom_call.1} parent=1 // loop_body
      %s26 = ssub.s32 %s21, 1
      %s27 = ssub.s32 %s21, 2
      %s34 = sadd.s32 1, %s29
      %p35 = scmp.ge.s32.totalorder %s34, 1
      %s36 = scalar_select %p35, 0, %s34
      %s37 = sadd.s32 1, %s28
      %s38 = scalar_select %p35, %s37, %s28
      %p39 = scmp.ge.s32.totalorder %s38, 2
      %s40 = scalar_select %p39, 0, %s38
      %s42 = sadd.s32 %s41, 1
      %p45 = scmp.eq.s32.totalorder %s21, 1
      %p46 = scmp.ne.s32.totalorder %s41, %s43
      %p47 = scmp.eq.s32.totalorder %s21, 0
      %p48 = por %p46, %p47
      %p49 = scmp.ne.s32.totalorder %s41, %s43
      %p50 = scmp.eq.s32.totalorder %s26, 1
      %p51 = por %p49, %p50
      %p52 = scmp.ne.s32.totalorder %s43, %s44
      %p53 = scmp.eq.s32.totalorder %s26, 0
      %p54 = por %p52, %p53
      %p55 = scmp.ne.s32.totalorder %s43, %s44
      %p56 = scmp.eq.s32.totalorder %s27, 1
      %p57 = por %p55, %p56
      %p59 = scmp.ne.s32.totalorder %s44, %s58
      %p60 = scmp.eq.s32.totalorder %s27, 0
      %p61 = por %p59, %p60
      %s63 = sadd.s32 %s62, 1
      %p66 = scmp.eq.s32.totalorder %s21, 1
      %p67 = scmp.ne.s32.totalorder %s62, %s64
      %p68 = scmp.eq.s32.totalorder %s21, 0
      %p69 = por %p67, %p68
      %p70 = scmp.ne.s32.totalorder %s62, %s64
      %p71 = scmp.eq.s32.totalorder %s26, 1
      %p72 = por %p70, %p71
      %p73 = scmp.ne.s32.totalorder %s64, %s65
      %p74 = scmp.eq.s32.totalorder %s26, 0
      %p75 = por %p73, %p74
      %p76 = scmp.ne.s32.totalorder %s64, %s65
      %p77 = scmp.eq.s32.totalorder %s27, 1
      %p78 = por %p76, %p77
      %p80 = scmp.ne.s32.totalorder %s65, %s79
      %p81 = scmp.eq.s32.totalorder %s27, 0
      %p82 = por %p80, %p81
      %s84 = sadd.s32 %s83, 1
      %p87 = scmp.eq.s32.totalorder %s21, 1
      %p88 = scmp.ne.s32.totalorder %s83, %s85
      %p89 = scmp.eq.s32.totalorder %s21, 0
      %p90 = por %p88, %p89
      %p91 = scmp.ne.s32.totalorder %s83, %s85
      %p92 = scmp.eq.s32.totalorder %s26, 1
      %p93 = por %p91, %p92
      %p94 = scmp.ne.s32.totalorder %s85, %s86
      %p95 = scmp.eq.s32.totalorder %s26, 0
      %p96 = por %p94, %p95
      %p97 = scmp.ne.s32.totalorder %s85, %s86
      %p98 = scmp.eq.s32.totalorder %s27, 1
      %p99 = por %p97, %p98
      %p101 = scmp.ne.s32.totalorder %s86, %s100
      %p102 = scmp.eq.s32.totalorder %s27, 0
      %p103 = por %p101, %p102
      %s105 = sadd.s32 %s104, 1
      %p108 = scmp.eq.s32.totalorder %s21, 1
      %p109 = scmp.ne.s32.totalorder %s104, %s106
      %p110 = scmp.eq.s32.totalorder %s21, 0
      %p111 = por %p109, %p110
      %p112 = scmp.ne.s32.totalorder %s104, %s106
      %p113 = scmp.eq.s32.totalorder %s26, 1
      %p114 = por %p112, %p113
      %p115 = scmp.ne.s32.totalorder %s106, %s107
      %p116 = scmp.eq.s32.totalorder %s26, 0
      %p117 = por %p115, %p116
      %p118 = scmp.ne.s32.totalorder %s106, %s107
      %p119 = scmp.eq.s32.totalorder %s27, 1
      %p120 = por %p118, %p119
      %p122 = scmp.ne.s32.totalorder %s107, %s121
      %p123 = scmp.eq.s32.totalorder %s27, 0
      %p124 = por %p122, %p123
      %s125 = ssub.s32 %s28, %s40
      %s126 = ssub.s32 %s29, %s36
      %s127 = sor.u32 %s125, %s126
      %p128 = scmp.eq.s32.totalorder %s127, 0
      %s130 = sadd.s32 %s129, 1
      %s131 = scalar_select %p128, %s129, %s130
      %p134 = pneg %p128
      %p135 = scmp.eq.s32.totalorder %s21, 1
      %p136 = por %p134, %p135
      %p137 = scmp.ne.s32.totalorder %s129, %s132
      %p138 = scmp.eq.s32.totalorder %s21, 0
      %p139 = por %p137, %p138
      %p140 = scmp.ne.s32.totalorder %s129, %s132
      %p141 = scmp.eq.s32.totalorder %s26, 1
      %p142 = por %p140, %p141
      %p143 = scmp.ne.s32.totalorder %s132, %s133
      %p144 = scmp.eq.s32.totalorder %s26, 0
      %p145 = por %p143, %p144
      %p146 = scmp.ne.s32.totalorder %s132, %s133
      %p147 = scmp.eq.s32.totalorder %s27, 1
      %p148 = por %p146, %p147
      %p150 = scmp.ne.s32.totalorder %s133, %s149
      %p151 = scmp.eq.s32.totalorder %s27, 0
      %p152 = por %p150, %p151
      %s153 = ssub.s32 %s28, %s40
      %s154 = ssub.s32 %s29, %s36
      %s155 = sor.u32 %s153, %s154
      %p156 = scmp.eq.s32.totalorder %s155, 0
      %s158 = sadd.s32 %s157, 1
      %s159 = scalar_select %p156, %s157, %s158
      %p162 = pneg %p156
      %p163 = scmp.eq.s32.totalorder %s21, 1
      %p164 = por %p162, %p163
      %p165 = scmp.ne.s32.totalorder %s157, %s160
      %p166 = scmp.eq.s32.totalorder %s21, 0
      %p167 = por %p165, %p166
      %p168 = scmp.ne.s32.totalorder %s157, %s160
      %p169 = scmp.eq.s32.totalorder %s26, 1
      %p170 = por %p168, %p169
      %p171 = scmp.ne.s32.totalorder %s160, %s161
      %p172 = scmp.eq.s32.totalorder %s26, 0
      %p173 = por %p171, %p172
      %p174 = scmp.ne.s32.totalorder %s160, %s161
      %p175 = scmp.eq.s32.totalorder %s27, 1
      %p176 = por %p174, %p175
      %p178 = scmp.ne.s32.totalorder %s161, %s177
      %p179 = scmp.eq.s32.totalorder %s27, 0
      %p180 = por %p178, %p179
      %s181 = ssub.s32 %s28, %s40
      %s182 = ssub.s32 %s29, %s36
      %s183 = sor.u32 %s181, %s182
      %p184 = scmp.eq.s32.totalorder %s183, 0
      %s186 = sadd.s32 %s185, 1
      %s187 = scalar_select %p184, %s185, %s186
      %p190 = pneg %p184
      %p191 = scmp.eq.s32.totalorder %s21, 1
      %p192 = por %p190, %p191
      %p193 = scmp.ne.s32.totalorder %s185, %s188
      %p194 = scmp.eq.s32.totalorder %s21, 0
      %p195 = por %p193, %p194
      %p196 = scmp.ne.s32.totalorder %s185, %s188
      %p197 = scmp.eq.s32.totalorder %s26, 1
      %p198 = por %p196, %p197
      %p199 = scmp.ne.s32.totalorder %s188, %s189
      %p200 = scmp.eq.s32.totalorder %s26, 0
      %p201 = por %p199, %p200
      %p202 = scmp.ne.s32.totalorder %s188, %s189
      %p203 = scmp.eq.s32.totalorder %s27, 1
      %p204 = por %p202, %p203
      %p206 = scmp.ne.s32.totalorder %s189, %s205
      %p207 = scmp.eq.s32.totalorder %s27, 0
      %p208 = por %p206, %p207
      %p209 = scmp.le.s32.totalorder 1, %s21
      %p210 = scmp.lt.s32.totalorder %s21, 3
      %p211 = pnand %p209, %p210
      %p212 = pneg %p211
      // Predicated region
      $region9: #{tpu_custom_call.1} parent=5 // pred_check
        _
      $region10: #{tpu_custom_call.1} parent=5 // pred_check_branch
        %214 = sbr.rel (%p211) target = $region12
      $region11: #{tpu_custom_call.1} parent=5 // pred_region
        %s215 = ssub.s32 %s21, 1
        // Predicated region
        $region13: #{tpu_custom_call.1} parent=11 // pred_check
          %p216 = pneg %p54
        $region14: #{tpu_custom_call.1} parent=11 // pred_check_branch
          %218 = sbr.rel (%p216) target = $region16
        $region15: #{tpu_custom_call.1} parent=11 // pred_region
          %220 = vsyncadd [#allocation5], 0
          %s222 = sshll.u32 %s0, 4
          %s223 = int_to_ptr.vmem [resolvable:$true] %s222
          %225 = dma.vmem_to_smem %s223, 16, [#allocation2], [#allocation5]
        $region16: #{tpu_custom_call.1} parent=11 // pred_fallthru
          _
        // Predicated region
        $region17: #{tpu_custom_call.1} parent=11 // pred_check
          %p226 = pneg %p75
        $region18: #{tpu_custom_call.1} parent=11 // pred_check_branch
          %228 = sbr.rel (%p226) target = $region20
        $region19: #{tpu_custom_call.1} parent=11 // pred_region
          %230 = vsyncadd [#allocation7], 0
          %s232 = sshll.u32 %s1, 4
          %s233 = int_to_ptr.vmem [resolvable:$true] %s232
          %235 = dma.vmem_to_smem %s233, 16, [#allocation6], [#allocation7]
        $region20: #{tpu_custom_call.1} parent=11 // pred_fallthru
          _
        // Predicated region
        $region21: #{tpu_custom_call.1} parent=11 // pred_check
          %p236 = pneg %p96
        $region22: #{tpu_custom_call.1} parent=11 // pred_check_branch
          %238 = sbr.rel (%p236) target = $region24
        $region23: #{tpu_custom_call.1} parent=11 // pred_region
          %240 = vsyncadd [#allocation7], 0
          %s242 = sshll.u32 %s2, 4
          %s243 = int_to_ptr.vmem [resolvable:$true] %s242
          %245 = dma.vmem_to_smem %s243, 16, [#allocation8], [#allocation7]
        $region24: #{tpu_custom_call.1} parent=11 // pred_fallthru
          _
        // Predicated region
        $region25: #{tpu_custom_call.1} parent=11 // pred_check
          %p246 = pneg %p117
        $region26: #{tpu_custom_call.1} parent=11 // pred_check_branch
          %248 = sbr.rel (%p246) target = $region28
        $region27: #{tpu_custom_call.1} parent=11 // pred_region
          _
        $region28: #{tpu_custom_call.1} parent=11 // pred_fallthru
          _
      $region12: #{tpu_custom_call.1} parent=5 // pred_fallthru
        _
      %p249 = scmp.lt.s32.totalorder %s21, 2
      // Predicated region
      $region29: #{tpu_custom_call.1} parent=5 // pred_check
        %p250 = pneg %p249
      $region30: #{tpu_custom_call.1} parent=5 // pred_check_branch
        %252 = sbr.rel (%p250) target = $region32
      $region31: #{tpu_custom_call.1} parent=5 // pred_region
        // Predicated region
        $region33: #{tpu_custom_call.1} parent=31 // pred_check
          %p253 = pneg %p139
        $region34: #{tpu_custom_call.1} parent=31 // pred_check_branch
          %255 = sbr.rel (%p253) target = $region36
        $region35: #{tpu_custom_call.1} parent=31 // pred_region
          %s256 = sand.u32 %s129, 1
          %s257 = scalar_lea.sflag [#allocation3], %s256
          %s258 = sand.u32 %s129, 1
          %s259 = smul.addr %s258, 16
          %s260 = scalar_lea.vmem [#allocation9], %s259
          %s261 = smul.u32 4, %s29
          %263 = vsyncadd %s257, 0
          %s264 = smul.addr %s28, 4
          %s265 = sadd.s32 %s261, %s264
          %s266 = smul.addr %s265, 4
          %s267 = scalar_lea.hbm %s4, %s266
          %s269 = sshll.u32 %s267, 4
          %s270 = int_to_ptr.hbm [resolvable:$true] %s269
          %s271 = sshll.u32 %s260, 4
          %s272 = int_to_ptr.vmem [resolvable:$true] %s271
          %274 = dma.hbm_to_vmem [thread:$0]  %s270, 256, %s272, %s257
        $region36: #{tpu_custom_call.1} parent=31 // pred_fallthru
          _
      $region32: #{tpu_custom_call.1} parent=5 // pred_fallthru
        _
      %p275 = scmp.le.s32.totalorder 1, %s21
      %p276 = scmp.lt.s32.totalorder %s21, 3
      %p277 = pnand %p275, %p276
      %p278 = pneg %p277
      // Predicated region
      $region37: #{tpu_custom_call.1} parent=5 // pred_check
        _
      $region38: #{tpu_custom_call.1} parent=5 // pred_check_branch
        %280 = sbr.rel (%p277) target = $region40
      $region39: #{tpu_custom_call.1} parent=5 // pred_region
        %s281 = ssub.s32 %s21, 1
        // Predicated region
        $region41: #{tpu_custom_call.1} parent=39 // pred_check
          %p282 = pneg %p54
        $region42: #{tpu_custom_call.1} parent=39 // pred_check_branch
          %284 = sbr.rel (%p282) target = $region44
        $region43: #{tpu_custom_call.1} parent=39 // pred_region
          %286 = dma.done [#allocation5], 16
        $region44: #{tpu_custom_call.1} parent=39 // pred_fallthru
          _
        // Predicated region
        $region45: #{tpu_custom_call.1} parent=39 // pred_check
          %p287 = pneg %p75
        $region46: #{tpu_custom_call.1} parent=39 // pred_check_branch
          %289 = sbr.rel (%p287) target = $region48
        $region47: #{tpu_custom_call.1} parent=39 // pred_region
          %291 = dma.done [#allocation7], 16
        $region48: #{tpu_custom_call.1} parent=39 // pred_fallthru
          _
        // Predicated region
        $region49: #{tpu_custom_call.1} parent=39 // pred_check
          %p292 = pneg %p96
        $region50: #{tpu_custom_call.1} parent=39 // pred_check_branch
          %294 = sbr.rel (%p292) target = $region52
        $region51: #{tpu_custom_call.1} parent=39 // pred_region
          %296 = dma.done [#allocation7], 16
        $region52: #{tpu_custom_call.1} parent=39 // pred_fallthru
          _
        %s297 = sand.u32 %s132, 1
        %s298 = scalar_lea.sflag [#allocation3], %s297
        %s299 = sand.u32 %s132, 1
        %s300 = smul.addr %s299, 16
        %s301 = scalar_lea.vmem [#allocation9], %s300
        // Predicated region
        $region53: #{tpu_custom_call.1} parent=39 // pred_check
          %p302 = pneg %p145
        $region54: #{tpu_custom_call.1} parent=39 // pred_check_branch
          %304 = sbr.rel (%p302) target = $region56
        $region55: #{tpu_custom_call.1} parent=39 // pred_region
          %306 = dma.done %s298, 256
        $region56: #{tpu_custom_call.1} parent=39 // pred_fallthru
          _
        %307 = sfence
        %p308 = pneg %p54
        %p309 = pneg %p51
        %p310 = pneg %p75
        %p311 = pneg %p72
        %p312 = pneg %p96
        %p313 = pneg %p93
        %p314 = pneg %p117
        %p315 = pneg %p114
        %s316 = sand.u32 %s132, 1
        %s317 = scalar_lea.sflag [#allocation3], %s316
        %s318 = sand.u32 %s132, 1
        %s319 = smul.addr %s318, 16
        %s320 = scalar_lea.vmem [#allocation9], %s319
        %p321 = pneg %p145
        %p322 = pneg %p142
        %p323 = pneg %p173
        %p324 = pneg %p170
        %s325 = sand.u32 %s160, 1
        %s326 = scalar_lea.sflag [#allocation4], %s325
        %s327 = sand.u32 %s160, 1
        %s328 = smul.addr %s327, 8
        %s329 = scalar_lea.vmem [#allocation10], %s328
        %p330 = pneg %p201
        %p331 = pneg %p198
        %s332 = smul.u32 4, %s31
        %p333 = scmp.lt.s32.totalorder %s30, 1
        %s334 = scalar_select %p333, %s30, 1
        %p335 = scmp.lt.s32.totalorder %s332, 3
        %s336 = scalar_select %p335, %s332, 3
        %s337 = smul.addr %s334, 4
        %s338 = sadd.s32 %s336, %s337
        %s339 = smul.addr %s338, 4
        %s340 = scalar_lea.vmem %s6, %s339
        %s341 = smul.u32 4, %s31
        %s342 = smul.u32 4, %s31
        %s343 = smul.u32 4, %s31
        %p344 = scmp.lt.s32.totalorder %s30, 1
        %s345 = scalar_select %p344, %s30, 1
        %p346 = scmp.lt.s32.totalorder %s343, 3
        %s347 = scalar_select %p346, %s343, 3
        %s348 = smul.addr %s345, 4
        %s349 = sadd.s32 %s347, %s348
        %s350 = smul.addr %s349, 4
        %s351 = scalar_lea.vmem %s6, %s350
        %s352 = smul.u32 4, %s31
        %v353 = vld [vmem:[%s301] sm:$0xff]
        %v354 = vld [vmem:[%s301 + $0x8] sm:$0xff]
        %v355 = vld [vmem:[%s3] sm:$0xf]
        %357 = vset.pattern.permute.xlu0 0
        %358 = vperm.xlu0 %357, %v355
        %v359 = vpop.permute.xlu0 %358
        %v361 = vunpack.c.l.s4 839922192
        %v362 = vunpack.c.0.s8 %v361
        %v363 = vperm.slane %v359, %v362
        %v365 = vsub.f32 %v353, %v363
        %v366 = vsub.f32 %v354, %v363
        %v367 = vmul.f32 %v365, %v365
        %v368 = vmul.f32 %v366, %v366
        %371 = vst [vmem:[#allocation1] ss:$2 sm:$0xff] %v367
        %s372 = scalar_lea.vmem [#allocation1], 16
        %373 = vst [vmem:[%s372] ss:$2 sm:$0xff] %v368
        %v374 = vld.sshfl [vmem:[#allocation1] sm:$0xff pattern:$0x75316420]
        %v375 = vld.sshfl [vmem:[#allocation1 + $0x8] sm:$0xff pattern:$0x75316420]
        %v376 = vld.sshfl [vmem:[#allocation1 + $0x10] sm:$0xff pattern:$0x75316420]
        %v377 = vld.sshfl [vmem:[#allocation1 + $0x18] sm:$0xff pattern:$0x75316420]
        %vm382 = vcmask 1043456
        %v383 = vsel %vm382, %v374, 0.0
        %v384 = vrot.slane %v383, 4
        %v385 = vadd.f32 %v383, %v384
        %v386 = vrot.slane %v385, 2
        %v387 = vadd.f32 %v385, %v386
        %v388 = vrot.slane %v387, 1
        %v389 = vadd.f32 %v387, %v388
        %v390 = vsel %vm382, %v375, 0.0
        %v391 = vrot.slane %v390, 4
        %v392 = vadd.f32 %v390, %v391
        %v393 = vrot.slane %v392, 2
        %v394 = vadd.f32 %v392, %v393
        %v395 = vrot.slane %v394, 1
        %v396 = vadd.f32 %v394, %v395
        %v397 = vsel %vm382, %v376, 0.0
        %v398 = vrot.slane %v397, 4
        %v399 = vadd.f32 %v397, %v398
        %v400 = vrot.slane %v399, 2
        %v401 = vadd.f32 %v399, %v400
        %v402 = vrot.slane %v401, 1
        %v403 = vadd.f32 %v401, %v402
        %v404 = vsel %vm382, %v377, 0.0
        %v405 = vrot.slane %v404, 4
        %v406 = vadd.f32 %v404, %v405
        %v407 = vrot.slane %v406, 2
        %v408 = vadd.f32 %v406, %v407
        %v409 = vrot.slane %v408, 1
        %v410 = vadd.f32 %v408, %v409
        %s411 = sld [smem:[#allocation2]]
        %v412 = vstv %s411
        %v413 = vmul.f32 %v412, %v389
        %v414 = vmul.f32 %v412, %v396
        %v415 = vmul.f32 %v412, %v403
        %v416 = vmul.f32 %v412, %v410
        %v417 = vmul.f32 %v413, 1.442695
        %v418 = vpow.pop %v417
        %v419 = vmul.f32 %v414, 1.442695
        %v420 = vpow.pop %v419
        %v421 = vmul.f32 %v415, 1.442695
        %v422 = vpow.pop %v421
        %v423 = vmul.f32 %v416, 1.442695
        %v424 = vpow.pop %v423
        %s425 = sld [smem:[#allocation6]]
        %v426 = vstv %s425
        %v427 = vmul.f32 %v426, %v418
        %v428 = vmul.f32 %v426, %v420
        %v429 = vmul.f32 %v426, %v422
        %v430 = vmul.f32 %v426, %v424
        %v431 = vadd.f32 %v427, 0.0
        %v432 = vadd.f32 %v428, 0.0
        %v433 = vadd.f32 %v429, 0.0
        %v434 = vadd.f32 %v430, 0.0
        %s435 = sld [smem:[#allocation8]]
        %v436 = vstv %s435
        %v437 = vmul.f32 %v436, %v418
        %v438 = vmul.f32 %v436, %v420
        %v439 = vmul.f32 %v436, %v422
        %v440 = vmul.f32 %v436, %v424
        %v441 = vadd.f32 %v437, 0.0
        %v442 = vadd.f32 %v438, 0.0
        %v443 = vadd.f32 %v439, 0.0
        %v444 = vadd.f32 %v440, 0.0
        %v445 = vld [vmem:[%s3] sm:$0xf]
        %447 = vset.pattern.permute.xlu0 1
        %448 = vperm.xlu0 %447, %v445
        %v449 = vpop.permute.xlu0 %448
        %v451 = vunpack.c.l.s4 839922192
        %v452 = vunpack.c.0.s8 %v451
        %v453 = vperm.slane %v449, %v452
        %v455 = vsub.f32 %v353, %v453
        %v456 = vsub.f32 %v354, %v453
        %v457 = vmul.f32 %v455, %v455
        %v458 = vmul.f32 %v456, %v456
        %461 = vst [vmem:[#allocation1] ss:$2 sm:$0xff] %v457
        %s462 = scalar_lea.vmem [#allocation1], 16
        %463 = vst [vmem:[%s462] ss:$2 sm:$0xff] %v458
        %v464 = vld.sshfl [vmem:[#allocation1] sm:$0xff pattern:$0x75316420]
        %v465 = vld.sshfl [vmem:[#allocation1 + $0x8] sm:$0xff pattern:$0x75316420]
        %v466 = vld.sshfl [vmem:[#allocation1 + $0x10] sm:$0xff pattern:$0x75316420]
        %v467 = vld.sshfl [vmem:[#allocation1 + $0x18] sm:$0xff pattern:$0x75316420]
        %v472 = vsel %vm382, %v464, 0.0
        %v473 = vrot.slane %v472, 4
        %v474 = vadd.f32 %v472, %v473
        %v475 = vrot.slane %v474, 2
        %v476 = vadd.f32 %v474, %v475
        %v477 = vrot.slane %v476, 1
        %v478 = vadd.f32 %v476, %v477
        %v479 = vsel %vm382, %v465, 0.0
        %v480 = vrot.slane %v479, 4
        %v481 = vadd.f32 %v479, %v480
        %v482 = vrot.slane %v481, 2
        %v483 = vadd.f32 %v481, %v482
        %v484 = vrot.slane %v483, 1
        %v485 = vadd.f32 %v483, %v484
        %v486 = vsel %vm382, %v466, 0.0
        %v487 = vrot.slane %v486, 4
        %v488 = vadd.f32 %v486, %v487
        %v489 = vrot.slane %v488, 2
        %v490 = vadd.f32 %v488, %v489
        %v491 = vrot.slane %v490, 1
        %v492 = vadd.f32 %v490, %v491
        %v493 = vsel %vm382, %v467, 0.0
        %v494 = vrot.slane %v493, 4
        %v495 = vadd.f32 %v493, %v494
        %v496 = vrot.slane %v495, 2
        %v497 = vadd.f32 %v495, %v496
        %v498 = vrot.slane %v497, 1
        %v499 = vadd.f32 %v497, %v498
        %s500 = sld [smem:[#allocation2 + $0x1]]
        %v501 = vstv %s500
        %v502 = vmul.f32 %v501, %v478
        %v503 = vmul.f32 %v501, %v485
        %v504 = vmul.f32 %v501, %v492
        %v505 = vmul.f32 %v501, %v499
        %v506 = vmul.f32 %v502, 1.442695
        %v507 = vpow.pop %v506
        %v508 = vmul.f32 %v503, 1.442695
        %v509 = vpow.pop %v508
        %v510 = vmul.f32 %v504, 1.442695
        %v511 = vpow.pop %v510
        %v512 = vmul.f32 %v505, 1.442695
        %v513 = vpow.pop %v512
        %s514 = sld [smem:[#allocation6 + $0x1]]
        %v515 = vstv %s514
        %v516 = vmul.f32 %v515, %v507
        %v517 = vmul.f32 %v515, %v509
        %v518 = vmul.f32 %v515, %v511
        %v519 = vmul.f32 %v515, %v513
        %v520 = vadd.f32 %v431, %v516
        %v521 = vadd.f32 %v432, %v517
        %v522 = vadd.f32 %v433, %v518
        %v523 = vadd.f32 %v434, %v519
        %s524 = sld [smem:[#allocation8 + $0x1]]
        %v525 = vstv %s524
        %v526 = vmul.f32 %v525, %v507
        %v527 = vmul.f32 %v525, %v509
        %v528 = vmul.f32 %v525, %v511
        %v529 = vmul.f32 %v525, %v513
        %v530 = vadd.f32 %v441, %v526
        %v531 = vadd.f32 %v442, %v527
        %v532 = vadd.f32 %v443, %v528
        %v533 = vadd.f32 %v444, %v529
        %v534 = vsub.f32 0.0, %v520
        %v535 = vsub.f32 0.0, %v521
        %v536 = vsub.f32 0.0, %v522
        %v537 = vsub.f32 0.0, %v523
        %v538 = vmul.f32 %v534, 1.442695
        %v539 = vpow.pop %v538
        %v540 = vmul.f32 %v535, 1.442695
        %v541 = vpow.pop %v540
        %v542 = vmul.f32 %v536, 1.442695
        %v543 = vpow.pop %v542
        %v544 = vmul.f32 %v537, 1.442695
        %v545 = vpow.pop %v544
        %v546 = vsub.f32 0.0, %v530
        %v547 = vsub.f32 0.0, %v531
        %v548 = vsub.f32 0.0, %v532
        %v549 = vsub.f32 0.0, %v533
        %v550 = vmul.f32 %v546, 1.442695
        %v551 = vpow.pop %v550
        %v552 = vmul.f32 %v547, 1.442695
        %v553 = vpow.pop %v552
        %v554 = vmul.f32 %v548, 1.442695
        %v555 = vpow.pop %v554
        %v556 = vmul.f32 %v549, 1.442695
        %v557 = vpow.pop %v556
        %v558 = vadd.f32 %v551, %v539
        %v559 = vadd.f32 %v553, %v541
        %v560 = vadd.f32 %v555, %v543
        %v561 = vadd.f32 %v557, %v545
        %v562 = vrcp.pop %v558
        %v563 = vrcp.pop %v559
        %v564 = vrcp.pop %v560
        %v565 = vrcp.pop %v561
        %v566 = vmul.f32 %v558, %v562
        %v567 = vmul.f32 %v559, %v563
        %v568 = vmul.f32 %v560, %v564
        %v569 = vmul.f32 %v561, %v565
        %v570 = vsub.f32 2.0, %v566
        %v571 = vsub.f32 2.0, %v567
        %v572 = vsub.f32 2.0, %v568
        %v573 = vsub.f32 2.0, %v569
        %v574 = vmul.f32 %v562, %v570
        %v575 = vmul.f32 %v563, %v571
        %v576 = vmul.f32 %v564, %v572
        %v577 = vmul.f32 %v565, %v573
        %v578 = vmul.f32 %v558, %v574
        %v579 = vmul.f32 %v559, %v575
        %v580 = vmul.f32 %v560, %v576
        %v581 = vmul.f32 %v561, %v577
        %v582 = vsub.f32 2.0, %v578
        %v583 = vsub.f32 2.0, %v579
        %v584 = vsub.f32 2.0, %v580
        %v585 = vsub.f32 2.0, %v581
        %v586 = vmul.f32 %v574, %v582
        %v587 = vmul.f32 %v575, %v583
        %v588 = vmul.f32 %v576, %v584
        %v589 = vmul.f32 %v577, %v585
        %v590 = vmul.f32 %v551, %v586
        %v591 = vmul.f32 %v553, %v587
        %v592 = vmul.f32 %v555, %v588
        %v593 = vmul.f32 %v557, %v589
        %v598 = vrot.slane %v591, 7
        %v599 = vrot.slane %v592, 6
        %v600 = vrot.slane %v593, 5
        %vm601 = vcmask 1040384
        %v602 = vsel %vm601, %v590, %v598
        %vm603 = vcmask 1042434
        %v604 = vsel %vm603, %v599, %v600
        %vm605 = vcmask 1041408
        %v606 = vsel %vm605, %v602, %v604
        %v608 = vlaneseq
        %vm609 = vcmp.ge.s32.totalorder %v608, 0
        %vm610 = vcmp.lt.s32.totalorder %v608, 512
        %vm611 = vmand %vm609, %vm610
        %612 = vst.msk [vmem:[%s329] ss:$2 sm:$0xf] %vm611, %v606
        %v613 = vmul.f32 %v539, %v586
        %v614 = vmul.f32 %v541, %v587
        %v615 = vmul.f32 %v543, %v588
        %v616 = vmul.f32 %v545, %v589
        %v621 = vrot.slane %v614, 7
        %v622 = vrot.slane %v615, 6
        %v623 = vrot.slane %v616, 5
        %v624 = vsel %vm601, %v613, %v621
        %v625 = vsel %vm603, %v622, %v623
        %v626 = vsel %vm605, %v624, %v625
        %s628 = scalar_lea.vmem %s329, 1 [#allocation10]
        %629 = vst.msk [vmem:[%s628] ss:$2 sm:$0xf] %vm611, %v626
        %v630 = vsub.f32 1.0, %v539
        %v631 = vsub.f32 1.0, %v541
        %v632 = vsub.f32 1.0, %v543
        %v633 = vsub.f32 1.0, %v545
        %v634 = vsub.f32 1.0, %v551
        %v635 = vsub.f32 1.0, %v553
        %v636 = vsub.f32 1.0, %v555
        %v637 = vsub.f32 1.0, %v557
        %v638 = vmul.f32 %v630, %v634
        %v639 = vmul.f32 %v631, %v635
        %v640 = vmul.f32 %v632, %v636
        %v641 = vmul.f32 %v633, %v637
        %v642 = vsub.f32 1.0, %v638
        %v643 = vsub.f32 1.0, %v639
        %v644 = vsub.f32 1.0, %v640
        %v645 = vsub.f32 1.0, %v641
        %v646 = vrcp.pop %v642
        %v647 = vrcp.pop %v643
        %v648 = vrcp.pop %v644
        %v649 = vrcp.pop %v645
        %v650 = vmul.f32 %v642, %v646
        %v651 = vmul.f32 %v643, %v647
        %v652 = vmul.f32 %v644, %v648
        %v653 = vmul.f32 %v645, %v649
        %v654 = vsub.f32 2.0, %v650
        %v655 = vsub.f32 2.0, %v651
        %v656 = vsub.f32 2.0, %v652
        %v657 = vsub.f32 2.0, %v653
        %v658 = vmul.f32 %v646, %v654
        %v659 = vmul.f32 %v647, %v655
        %v660 = vmul.f32 %v648, %v656
        %v661 = vmul.f32 %v649, %v657
        %v662 = vmul.f32 %v642, %v658
        %v663 = vmul.f32 %v643, %v659
        %v664 = vmul.f32 %v644, %v660
        %v665 = vmul.f32 %v645, %v661
        %v666 = vsub.f32 2.0, %v662
        %v667 = vsub.f32 2.0, %v663
        %v668 = vsub.f32 2.0, %v664
        %v669 = vsub.f32 2.0, %v665
        %v670 = vmul.f32 %v658, %v666
        %v671 = vmul.f32 %v659, %v667
        %v672 = vmul.f32 %v660, %v668
        %v673 = vmul.f32 %v661, %v669
        %v674 = vmul.f32 %v670, %v630
        %v675 = vmul.f32 %v671, %v631
        %v676 = vmul.f32 %v672, %v632
        %v677 = vmul.f32 %v673, %v633
        %v678 = vmul.f32 %v674, %v551
        %v679 = vmul.f32 %v675, %v553
        %v680 = vmul.f32 %v676, %v555
        %v681 = vmul.f32 %v677, %v557
        %v686 = vrot.slane %v679, 7
        %v687 = vrot.slane %v680, 6
        %v688 = vrot.slane %v681, 5
        %v689 = vsel %vm601, %v678, %v686
        %v690 = vsel %vm603, %v687, %v688
        %v691 = vsel %vm605, %v689, %v690
        %693 = vst.msk [vmem:[%s351] ss:$4 sm:$0xf] %vm611, %v691
        %v694 = vmul.f32 %v670, %v634
        %v695 = vmul.f32 %v671, %v635
        %v696 = vmul.f32 %v672, %v636
        %v697 = vmul.f32 %v673, %v637
        %v698 = vmul.f32 %v694, %v539
        %v699 = vmul.f32 %v695, %v541
        %v700 = vmul.f32 %v696, %v543
        %v701 = vmul.f32 %v697, %v545
        %v706 = vrot.slane %v699, 7
        %v707 = vrot.slane %v700, 6
        %v708 = vrot.slane %v701, 5
        %v709 = vsel %vm601, %v698, %v706
        %v710 = vsel %vm603, %v707, %v708
        %v711 = vsel %vm605, %v709, %v710
        %s713 = scalar_lea.vmem %s351, 1
        %714 = vst.msk [vmem:[%s713] ss:$4 sm:$0xf] %vm611, %v711
        %v715 = vmul.f32 %v539, %v551
        %v716 = vmul.f32 %v541, %v553
        %v717 = vmul.f32 %v543, %v555
        %v718 = vmul.f32 %v545, %v557
        %v719 = vmul.f32 %v670, %v715
        %v720 = vmul.f32 %v671, %v716
        %v721 = vmul.f32 %v672, %v717
        %v722 = vmul.f32 %v673, %v718
        %v727 = vrot.slane %v720, 7
        %v728 = vrot.slane %v721, 6
        %v729 = vrot.slane %v722, 5
        %v730 = vsel %vm601, %v719, %v727
        %v731 = vsel %vm603, %v728, %v729
        %v732 = vsel %vm605, %v730, %v731
        %s734 = scalar_lea.vmem %s351, 2
        %735 = vst.msk [vmem:[%s734] ss:$4 sm:$0xf] %vm611, %v732
        %s736 = sand.u32 %s160, 1
        %s737 = scalar_lea.sflag [#allocation4], %s736
        %s738 = sand.u32 %s160, 1
        %s739 = smul.addr %s738, 8
        %s740 = scalar_lea.vmem [#allocation10], %s739
        %s741 = smul.u32 4, %s31
        %p742 = scmp.lt.s32.totalorder %s30, 1
        %s743 = scalar_select %p742, %s30, 1
        %p744 = scmp.lt.s32.totalorder %s741, 3
        %s745 = scalar_select %p744, %s741, 3
        %s746 = smul.addr %s743, 4
        %s747 = sadd.s32 %s745, %s746
        %s748 = smul.addr %s747, 4
        %s749 = scalar_lea.vmem %s6, %s748
        // Predicated region
        $region57: #{tpu_custom_call.1} parent=39 // pred_check
          %p750 = pneg %p170
        $region58: #{tpu_custom_call.1} parent=39 // pred_check_branch
          %752 = sbr.rel (%p750) target = $region60
        $region59: #{tpu_custom_call.1} parent=39 // pred_region
          %s753 = smul.u32 4, %s31
          %755 = vsyncadd %s737, 0
          %s756 = smul.addr %s30, 4
          %s757 = sadd.s32 %s753, %s756
          %s758 = smul.addr %s757, 2
          %s759 = scalar_lea.hbm %s5, %s758
          %s761 = sshll.u32 %s740, 4
          %s762 = int_to_ptr.vmem [resolvable:$true] %s761
          %s763 = sshll.u32 %s759, 4
          %s764 = int_to_ptr.hbm [resolvable:$true] %s763
          %766 = dma.vmem_to_hbm [thread:$0]  %s762, 128, %s764, %s737
        $region60: #{tpu_custom_call.1} parent=39 // pred_fallthru
          _
        // Predicated region
        $region61: #{tpu_custom_call.1} parent=39 // pred_check
          %p767 = pneg %p198
        $region62: #{tpu_custom_call.1} parent=39 // pred_check_branch
          %769 = sbr.rel (%p767) target = $region64
        $region63: #{tpu_custom_call.1} parent=39 // pred_region
          %s770 = smul.u32 4, %s31
        $region64: #{tpu_custom_call.1} parent=39 // pred_fallthru
          _
      $region40: #{tpu_custom_call.1} parent=5 // pred_fallthru
        _
      %p771 = scmp.le.s32.totalorder 2, %s21
      // Predicated region
      $region65: #{tpu_custom_call.1} parent=5 // pred_check
        %p772 = pneg %p771
      $region66: #{tpu_custom_call.1} parent=5 // pred_check_branch
        %774 = sbr.rel (%p772) target = $region68
      $region67: #{tpu_custom_call.1} parent=5 // pred_region
        %s775 = ssub.s32 %s21, 2
        // Predicated region
        $region69: #{tpu_custom_call.1} parent=67 // pred_check
          %p776 = pneg %p176
        $region70: #{tpu_custom_call.1} parent=67 // pred_check_branch
          %778 = sbr.rel (%p776) target = $region72
        $region71: #{tpu_custom_call.1} parent=67 // pred_region
          %s779 = sand.u32 %s161, 1
          %s780 = scalar_lea.sflag [#allocation4], %s779
          %s781 = sand.u32 %s161, 1
          %s782 = smul.addr %s781, 8
          %s783 = scalar_lea.vmem [#allocation10], %s782
          %785 = dma.done %s780, 128
        $region72: #{tpu_custom_call.1} parent=67 // pred_fallthru
          _
        // Predicated region
        $region73: #{tpu_custom_call.1} parent=67 // pred_check
          %p786 = pneg %p204
        $region74: #{tpu_custom_call.1} parent=67 // pred_check_branch
          %788 = sbr.rel (%p786) target = $region76
        $region75: #{tpu_custom_call.1} parent=67 // pred_region
          %s789 = smul.u32 4, %s33
          %p790 = scmp.lt.s32.totalorder %s32, 1
          %s791 = scalar_select %p790, %s32, 1
          %p792 = scmp.lt.s32.totalorder %s789, 3
          %s793 = scalar_select %p792, %s789, 3
          %s794 = smul.addr %s791, 4
          %s795 = sadd.s32 %s793, %s794
          %s796 = smul.addr %s795, 4
          %s797 = scalar_lea.vmem %s6, %s796
        $region76: #{tpu_custom_call.1} parent=67 // pred_fallthru
          _
      $region68: #{tpu_custom_call.1} parent=5 // pred_fallthru
        _
    $region6: #{tpu_custom_call.1} parent=1 // loop_footer
      %s25 = sadd.s32 1, %s21
    $region7: #{tpu_custom_call.1} parent=1 // loop_footer_branch
      %20 = sbr.rel target = $region3
    $region8: #{tpu_custom_call.1} parent=1 // loop_exit
      _
    %798 = vsyncpa [#allocation3], 1
    %s799 = scalar_lea.sflag [#allocation3], 1
    %800 = vsyncpa %s799, 1
    %801 = vsyncpa [#allocation4], 1
    %s802 = scalar_lea.sflag [#allocation4], 1
    %803 = vsyncpa %s802, 1
    %804 = vsyncpa [#allocation5], 1
    %s805 = scalar_lea.sflag [#allocation5], 1
    %806 = vsyncpa %s805, 1
    %807 = vsyncpa [#allocation7], 1

</llo_original>
